<compile_context>
chip_gen: v5e
topology: v5e:2x2
jax: 0.10.0
libtpu: 0.0.40
codegen_flags: <defaults>
</compile_context>

<pallas_src>
import jax
import jax.numpy as jnp
from jax import lax
from jax.experimental import pallas as pl
from jax.experimental.pallas import tpu as pltpu

NUM_ACTS = 5            # Sigmoid, Tanh, ReLU, GELU, Swish
NUM_OPS = NUM_ACTS + 2  # + Zero, Identity


def _gelu(v):
    # tanh-approximation GELU.
    # TODO(synk): repo's GELU class not shown; erf-GELU differs by <~1e-3.
    return 0.5 * v * (1.0 + jnp.tanh(0.7978845608028654 * (v + 0.044715 * v * v * v)))


def _swish(v):
    return v * jax.nn.sigmoid(v)


_ACT_FNS = (
    jax.nn.sigmoid,                 # 0: Sigmoid
    jnp.tanh,                       # 1: Tanh
    lambda v: jnp.maximum(v, 0.0),  # 2: ReLU
    _gelu,                          # 3: GELU
    _swish,                         # 4: Swish
)


# ---------------------------------------------------------------------------
# Edge kernel: one fused (tn, D) x (D, 5D) matmul + 5 activated column slabs.
# ---------------------------------------------------------------------------
def _edge_kernel(x_ref, w_ref, b_ref, o_sig, o_tanh, o_relu, o_gelu, o_swi):
    # x_ref : (tn, D)    row tile of flattened input
    # w_ref : (D, 5D)    block-permuted weight  (resident, constant index_map)
    # b_ref : (1, 5D)    block-permuted bias
    # o_*   : (tn, D)    one activated output per activation
    d = o_sig.shape[-1]
    y = jnp.dot(x_ref[...], w_ref[...], preferred_element_type=jnp.float32)
    y = y + b_ref[...]
    outs = (o_sig, o_tanh, o_relu, o_gelu, o_swi)
    for k in range(NUM_ACTS):  # unrolled at trace time; static column slabs
        outs[k][...] = _ACT_FNS[k](y[:, k * d:(k + 1) * d]).astype(outs[k].dtype)


def prepare_edge_params(weight, bias):
    """Permute torch-layout Linear(isize, 5*isize) params (interleaved d*5+k
    output columns) into the blocked layout used by the fused kernel.

    Do this ONCE per weight update, not per forward call.
      (x @ Wb + bb)[:, k*D + i] == act-k pre-activation == (x @ W.T + b)[:, i*5 + k]
    """
    out_f, d = weight.shape
    assert out_f == NUM_ACTS * d
    w_b = jnp.transpose(weight.reshape(d, NUM_ACTS, d), (2, 1, 0)).reshape(d, NUM_ACTS * d)
    b_b = jnp.transpose(bias.reshape(d, NUM_ACTS), (1, 0)).reshape(1, NUM_ACTS * d)
    return w_b, b_b


def _pick_row_tile(n, tile_n):
    """Largest tile <= tile_n that divides n and is a multiple of 8, preferring
    >= 2 grid blocks (feeds both TensorCores on v7x). Falls back to the full
    row count (full-dim block, divisibility waived) for ragged/small n."""
    if n <= 8:
        return n
    best = None
    for tn in range(min(tile_n, n), 7, -1):
        if n % tn == 0 and tn % 8 == 0:
            if n // tn >= 2:
                return tn
            if best is None:
                best = tn
    return best if best is not None else n


def edge_forward(x, w_blocked, b_blocked, *, tile_n=512):
    """selnet=None Edge forward. Returns [x, sigmoid, tanh, relu, gelu, swish]."""
    d = x.shape[-1]
    a = NUM_ACTS
    lead = x.shape[:-1]
    xf = x.reshape(-1, d)
    n = xf.shape[0]
    tn = _pick_row_tile(n, tile_n)
    grid = (n // tn,)

    itemsize = jnp.dtype(x.dtype).itemsize
    w_itemsize = jnp.dtype(w_blocked.dtype).itemsize
    # double-buffered x tile + 5 out tiles, resident weight/bias, + headroom
    needed = 2 * (tn * d + 5 * tn * d) * itemsize
    needed += 2 * (d * a * d + a * d) * w_itemsize
    vmem_limit = int(min(max(needed + (4 << 20), 16 << 20), 128 << 20))

    out_shape = tuple(jax.ShapeDtypeStruct((n, d), x.dtype) for _ in range(a))

    outs = pl.pallas_call(
        _edge_kernel,
        out_shape=out_shape,
        grid_spec=pltpu.PrefetchScalarGridSpec(
            num_scalar_prefetch=0,
            grid=grid,
            in_specs=[
                pl.BlockSpec((tn, d), lambda i: (i, 0)),       # row tile of x
                pl.BlockSpec((d, a * d), lambda i: (0, 0)),    # resident weight
                pl.BlockSpec((1, a * d), lambda i: (0, 0)),    # resident bias
            ],
            out_specs=tuple(
                pl.BlockSpec((tn, d), lambda i: (i, 0)) for _ in range(a)
            ),
        ),
        compiler_params=pltpu.CompilerParams(
            dimension_semantics=("parallel",),
            vmem_limit_bytes=vmem_limit,
        ),
    )(xf, w_blocked, b_blocked)

    return [x] + [o.reshape(*lead, d) for o in outs]


# ---------------------------------------------------------------------------
# Node / Cell glue (training path, selnet=None), built on the Edge kernel.
# ---------------------------------------------------------------------------
def node_forward(inputs, node_params):
    ni = len(inputs)
    w = jax.nn.softmax(node_params["weight"])          # (ni * 7,)
    w = w.reshape(ni, NUM_OPS)[:, 1:]                  # drop 'Zero' column -> (ni, 6)
    mixed = None
    for j, (xin, (w_b, b_b)) in enumerate(zip(inputs, node_params["edges"])):
        eouts = edge_forward(xin, w_b, b_b)            # [x, sig, tanh, relu, gelu, swish]
        contrib = sum(w[j, m] * eouts[m] for m in range(NUM_ACTS + 1))
        mixed = contrib if mixed is None else mixed + contrib
    return mixed


def cell_forward(x, cell_params):
    out = [x]
    for node_params in cell_params["nodes"]:
        out.append(node_forward(out, node_params))
    h = jnp.concatenate(out[1:], axis=-1)
    y = jnp.dot(h, cell_params["trans_w"].T, precision=lax.Precision.HIGHEST)
    if cell_params["trans_b"] is not None:
        y = y + cell_params["trans_b"]
    return y


def init_cell_params(key, num_node, isize, dtype=jnp.float32, enable_bias=True):
    # TODO(synk): enable_prev_ln_bias_default constant not shown; bias=True here.
    raw = {"nodes": []}
    for i in range(1, num_node + 1):
        key, kw = jax.random.split(key)
        edges = []
        for _ in range(i):
            key, ka, kb = jax.random.split(key, 3)
            w = jax.random.normal(ka, (NUM_ACTS * isize, isize), dtype) * 0.1
            b = jax.random.normal(kb, (NUM_ACTS * isize,), dtype) * 0.1
            edges.append((w, b))
        node_w = jax.random.normal(kw, (i * NUM_OPS,), dtype) * 0.5
        raw["nodes"].append({"weight": node_w, "edges_raw": edges})
    key, kt, ktb = jax.random.split(key, 3)
    raw["trans_w"] = jax.random.normal(kt, (isize, num_node * isize), dtype) * 0.1
    raw["trans_b"] = (jax.random.normal(ktb, (isize,), dtype) * 0.1) if enable_bias else None
    return raw


def prepare_cell_params(raw):
    """One-time layout permutation of every edge's Linear params (hoisted out of
    the per-forward path)."""
    return {
        "nodes": [
            {
                "weight": node["weight"],
                "edges": [prepare_edge_params(w, b) for (w, b) in node["edges_raw"]],
            }
            for node in raw["nodes"]
        ],
        "trans_w": raw["trans_w"],
        "trans_b": raw["trans_b"],
    }


# ---------------------------------------------------------------------------
# Pure-JAX reference of the torch semantics (for the correctness check).
# ---------------------------------------------------------------------------
def _edge_ref(x, weight, bias):
    d = x.shape[-1]
    y = jnp.dot(x, weight.T, precision=lax.Precision.HIGHEST) + bias
    yv = y.reshape(*x.shape[:-1], d, NUM_ACTS)   # view(..., isize, 5)
    return [x] + [_ACT_FNS[k](yv[..., k]) for k in range(NUM_ACTS)]


def _node_ref(inputs, node):
    ni = len(inputs)
    outs = []
    for xin, (w, b) in zip(inputs, node["edges_raw"]):
        outs.extend(_edge_ref(xin, w, b))
    stacked = jnp.stack(outs, axis=-1)                                     # (..., ni*6)
    wv = jax.nn.softmax(node["weight"]).reshape(ni, NUM_OPS)[:, 1:].reshape(-1)
    return jnp.sum(stacked * wv, axis=-1)                                  # torch .mv


def _cell_ref(x, raw):
    out = [x]
    for node in raw["nodes"]:
        out.append(_node_ref(out, node))
    h = jnp.concatenate(out[1:], axis=-1)
    y = jnp.dot(h, raw["trans_w"].T, precision=lax.Precision.HIGHEST)
    if raw["trans_b"] is not None:
        y = y + raw["trans_b"]
    return y


if __name__ == "__main__":
    B, S, ISIZE, NUM_NODE = 2, 8, 32, 2

    key = jax.random.PRNGKey(0)
    key, kx = jax.random.split(key)
    x = jax.random.normal(kx, (B, S, ISIZE), dtype=jnp.float32)

    raw = init_cell_params(key, NUM_NODE, ISIZE)
    params = prepare_cell_params(raw)   # one-time weight/bias column permutation

    # --- Edge-level check (the Pallas kernel itself) ---
    w0, b0 = raw["nodes"][0]["edges_raw"][0]
    edge_out = jax.block_until_ready(edge_forward(x, *params["nodes"][0]["edges"][0]))
    edge_ref = _edge_ref(x, w0, b0)
    for o, r in zip(edge_out, edge_ref):
        assert o.shape == r.shape
        assert float(jnp.max(jnp.abs(o - r))) < 1e-3

    # --- Full Cell forward (training / selnet=None path) ---
    y = jax.block_until_ready(jax.jit(cell_forward)(x, params))
    y_ref = _cell_ref(x, raw)
    assert y.shape == (B, S, ISIZE)
    assert float(jnp.max(jnp.abs(y - y_ref))) < 1e-3

    print("KERNEL_OK")
</pallas_src>

<mosaic_0001>
module attributes {stable_mosaic.version = 11 : i64} {
  func.func @_edge_kernel(%arg0: i32, %arg1: memref<8x32xf32, #tpu.memory_space<vmem>>, %arg2: memref<32x160xf32, #tpu.memory_space<vmem>>, %arg3: memref<1x160xf32, #tpu.memory_space<vmem>>, %arg4: memref<8x32xf32, #tpu.memory_space<vmem>>, %arg5: memref<8x32xf32, #tpu.memory_space<vmem>>, %arg6: memref<8x32xf32, #tpu.memory_space<vmem>>, %arg7: memref<8x32xf32, #tpu.memory_space<vmem>>, %arg8: memref<8x32xf32, #tpu.memory_space<vmem>>) attributes {dimension_semantics = [#tpu.dimension_semantics<parallel>], iteration_bounds = array<i64: 2>, scalar_prefetch = 0 : i64, scratch_operands = 0 : i64, tpu.core_type = #tpu.core_type<tc>, window_params = [{transform_indices = @transform_0, window_bounds = array<i64: 8, 32>}, {pipeline_mode = #tpu.pipeline_mode<synchronous>, transform_indices = @transform_1, window_bounds = array<i64: 32, 160>}, {pipeline_mode = #tpu.pipeline_mode<synchronous>, transform_indices = @transform_2, window_bounds = array<i64: 1, 160>}, {transform_indices = @transform_3, window_bounds = array<i64: 8, 32>}, {transform_indices = @transform_4, window_bounds = array<i64: 8, 32>}, {transform_indices = @transform_5, window_bounds = array<i64: 8, 32>}, {transform_indices = @transform_6, window_bounds = array<i64: 8, 32>}, {transform_indices = @transform_7, window_bounds = array<i64: 8, 32>}]} {
    %c0 = arith.constant 0 : index
    %c0_0 = arith.constant 0 : index
    %0 = vector.load %arg1[%c0, %c0_0] : memref<8x32xf32, #tpu.memory_space<vmem>>, vector<8x32xf32>
    %c0_1 = arith.constant 0 : index
    %c0_2 = arith.constant 0 : index
    %1 = vector.load %arg2[%c0_1, %c0_2] : memref<32x160xf32, #tpu.memory_space<vmem>>, vector<32x160xf32>
    %cst = arith.constant dense<0.000000e+00> : vector<8x160xf32>
    %2 = tpu.matmul %0, %1, %cst {dimension_numbers = #tpu.dot_dimension_numbers<[1], [0], [0], [1], [0, 0, 1, 1], [], []>} : vector<8x32xf32>, vector<32x160xf32>, vector<8x160xf32> -> vector<8x160xf32>
    %c0_3 = arith.constant 0 : index
    %c0_4 = arith.constant 0 : index
    %3 = vector.load %arg3[%c0_3, %c0_4] : memref<1x160xf32, #tpu.memory_space<vmem>>, vector<1x160xf32>
    %4 = vector.broadcast %3 : vector<1x160xf32> to vector<8x160xf32>
    %5 = arith.addf %2, %4 : vector<8x160xf32>
    %6 = vector.extract_strided_slice %5 {offsets = [0, 0], sizes = [8, 32], strides = [1, 1]} : vector<8x160xf32> to vector<8x32xf32>
    %7 = arith.negf %6 : vector<8x32xf32>
    %8 = math.exp %7 : vector<8x32xf32>
    %cst_5 = arith.constant 1.000000e+00 : f32
    %9 = vector.broadcast %cst_5 : f32 to vector<8x32xf32>
    %10 = arith.addf %9, %8 : vector<8x32xf32>
    %11 = arith.divf %9, %10 : vector<8x32xf32>
    %c0_6 = arith.constant 0 : index
    %c0_7 = arith.constant 0 : index
    %12 = vector.load %arg4[%c0_6, %c0_7] : memref<8x32xf32, #tpu.memory_space<vmem>>, vector<8x32xf32>
    tpu.vector_store %arg4[%c0_6, %c0_7], %11 {strides = array<i32>} : memref<8x32xf32, #tpu.memory_space<vmem>>, vector<8x32xf32>,
    %13 = vector.extract_strided_slice %5 {offsets = [0, 32], sizes = [8, 32], strides = [1, 1]} : vector<8x160xf32> to vector<8x32xf32>
    %14 = math.tanh %13 : vector<8x32xf32>
    %c0_8 = arith.constant 0 : index
    %c0_9 = arith.constant 0 : index
    %15 = vector.load %arg5[%c0_8, %c0_9] : memref<8x32xf32, #tpu.memory_space<vmem>>, vector<8x32xf32>
    tpu.vector_store %arg5[%c0_8, %c0_9], %14 {strides = array<i32>} : memref<8x32xf32, #tpu.memory_space<vmem>>, vector<8x32xf32>,
    %16 = vector.extract_strided_slice %5 {offsets = [0, 64], sizes = [8, 32], strides = [1, 1]} : vector<8x160xf32> to vector<8x32xf32>
    %cst_10 = arith.constant 0.000000e+00 : f32
    %17 = vector.broadcast %cst_10 : f32 to vector<8x32xf32>
    %18 = arith.maximumf %16, %17 : vector<8x32xf32>
    %c0_11 = arith.constant 0 : index
    %c0_12 = arith.constant 0 : index
    %19 = vector.load %arg6[%c0_11, %c0_12] : memref<8x32xf32, #tpu.memory_space<vmem>>, vector<8x32xf32>
    tpu.vector_store %arg6[%c0_11, %c0_12], %18 {strides = array<i32>} : memref<8x32xf32, #tpu.memory_space<vmem>>, vector<8x32xf32>,
    %20 = vector.extract_strided_slice %5 {offsets = [0, 96], sizes = [8, 32], strides = [1, 1]} : vector<8x160xf32> to vector<8x32xf32>
    %cst_13 = arith.constant 5.000000e-01 : f32
    %21 = vector.broadcast %cst_13 : f32 to vector<8x32xf32>
    %22 = arith.mulf %21, %20 : vector<8x32xf32>
    %cst_14 = arith.constant 4.471500e-02 : f32
    %23 = vector.broadcast %cst_14 : f32 to vector<8x32xf32>
    %24 = arith.mulf %23, %20 : vector<8x32xf32>
    %25 = arith.mulf %24, %20 : vector<8x32xf32>
    %26 = arith.mulf %25, %20 : vector<8x32xf32>
    %27 = arith.addf %20, %26 : vector<8x32xf32>
    %cst_15 = arith.constant 0.797884583 : f32
    %28 = vector.broadcast %cst_15 : f32 to vector<8x32xf32>
    %29 = arith.mulf %28, %27 : vector<8x32xf32>
    %30 = math.tanh %29 : vector<8x32xf32>
    %cst_16 = arith.constant 1.000000e+00 : f32
    %31 = vector.broadcast %cst_16 : f32 to vector<8x32xf32>
    %32 = arith.addf %31, %30 : vector<8x32xf32>
    %33 = arith.mulf %22, %32 : vector<8x32xf32>
    %c0_17 = arith.constant 0 : index
    %c0_18 = arith.constant 0 : index
    %34 = vector.load %arg7[%c0_17, %c0_18] : memref<8x32xf32, #tpu.memory_space<vmem>>, vector<8x32xf32>
    tpu.vector_store %arg7[%c0_17, %c0_18], %33 {strides = array<i32>} : memref<8x32xf32, #tpu.memory_space<vmem>>, vector<8x32xf32>,
    %35 = vector.extract_strided_slice %5 {offsets = [0, 128], sizes = [8, 32], strides = [1, 1]} : vector<8x160xf32> to vector<8x32xf32>
    %36 = arith.negf %35 : vector<8x32xf32>
    %37 = math.exp %36 : vector<8x32xf32>
    %cst_19 = arith.constant 1.000000e+00 : f32
    %38 = vector.broadcast %cst_19 : f32 to vector<8x32xf32>
    %39 = arith.addf %38, %37 : vector<8x32xf32>
    %40 = arith.divf %38, %39 : vector<8x32xf32>
    %41 = arith.mulf %35, %40 : vector<8x32xf32>
    %c0_20 = arith.constant 0 : index
    %c0_21 = arith.constant 0 : index
    %42 = vector.load %arg8[%c0_20, %c0_21] : memref<8x32xf32, #tpu.memory_space<vmem>>, vector<8x32xf32>
    tpu.vector_store %arg8[%c0_20, %c0_21], %41 {strides = array<i32>} : memref<8x32xf32, #tpu.memory_space<vmem>>, vector<8x32xf32>,
    return
  }
  func.func @transform_0(%arg0: i32) -> (i32, i32) {
    %c0_i32 = arith.constant 0 : i32
    %c0_i32_0 = arith.constant 0 : i32
    return %arg0, %c0_i32 : i32, i32
  }
  func.func @transform_1(%arg0: i32) -> (i32, i32) {
    %c0_i32 = arith.constant 0 : i32
    %c0_i32_0 = arith.constant 0 : i32
    %c0_i32_1 = arith.constant 0 : i32
    return %c0_i32, %c0_i32_0 : i32, i32
  }
  func.func @transform_2(%arg0: i32) -> (i32, i32) {
    %c0_i32 = arith.constant 0 : i32
    %c0_i32_0 = arith.constant 0 : i32
    %c0_i32_1 = arith.constant 0 : i32
    return %c0_i32, %c0_i32_0 : i32, i32
  }
  func.func @transform_3(%arg0: i32) -> (i32, i32) {
    %c0_i32 = arith.constant 0 : i32
    %c0_i32_0 = arith.constant 0 : i32
    return %arg0, %c0_i32 : i32, i32
  }
  func.func @transform_4(%arg0: i32) -> (i32, i32) {
    %c0_i32 = arith.constant 0 : i32
    %c0_i32_0 = arith.constant 0 : i32
    return %arg0, %c0_i32 : i32, i32
  }
  func.func @transform_5(%arg0: i32) -> (i32, i32) {
    %c0_i32 = arith.constant 0 : i32
    %c0_i32_0 = arith.constant 0 : i32
    return %arg0, %c0_i32 : i32, i32
  }
  func.func @transform_6(%arg0: i32) -> (i32, i32) {
    %c0_i32 = arith.constant 0 : i32
    %c0_i32_0 = arith.constant 0 : i32
    return %arg0, %c0_i32 : i32, i32
  }
  func.func @transform_7(%arg0: i32) -> (i32, i32) {
    %c0_i32 = arith.constant 0 : i32
    %c0_i32_0 = arith.constant 0 : i32
    return %arg0, %c0_i32 : i32, i32
  }
}

</mosaic_0001>

<llo_original>
// kernel: tpu_custom_call.1
$region0: #{tpu_custom_call.1}
  #allocation0 [shape = 'u32[]', space=smem, size = 0x4, offset = 0x4, fixed_abs, tag = 'smem constant byte address 0x4 - core index']
  #allocation1 [shape = 'u32[72,128]{1,0:T(1,128)}', space=vmem, size = 0x9000, scoped, tag = 'internal scratch']
  %s0 = inlined_call_operand.hbm [shape: f32[16,32], index: 0, kind: input, shape index: {}]
  %s1 = inlined_call_operand.hbm [shape: f32[32,160], index: 1, kind: input, shape index: {}]
  %s2 = inlined_call_operand.hbm [shape: f32[1,160], index: 2, kind: input, shape index: {}]
  %s3 = inlined_call_operand.hbm [shape: f32[16,32], index: 3, kind: output, shape index: {0}]
  %s4 = inlined_call_operand.hbm [shape: f32[16,32], index: 4, kind: output, shape index: {1}]
  %s5 = inlined_call_operand.hbm [shape: f32[16,32], index: 5, kind: output, shape index: {2}]
  %s6 = inlined_call_operand.hbm [shape: f32[16,32], index: 6, kind: output, shape index: {3}]
  %s7 = inlined_call_operand.hbm [shape: f32[16,32], index: 7, kind: output, shape index: {4}]
  %8 = xla_tuple %s3, %s4, %s5, %s6, %s7
  %s9 = sld [smem:[#allocation0]]
  $region89: #{tpu_custom_call.1} parent=0
    _
  %s11 = ssub.s32 1, %s9
  %s12 = scalar_select 0, %s11, %s9
  $region1: #{tpu_custom_call.1} parent=0
    #allocation2 [shape = 'u8[8192]{0}', space=vmem, size = 0x2000, scoped, tag = 'input window, operand 0']
    #allocation3 [shape = 's32[2]{0}', space=sflag, size = 0x8, scoped, tag = 'scoped memory for tpu_custom_call.1']
    #allocation4 [shape = 's32[2]{0}', space=sflag, size = 0x8, scoped, tag = 'scoped memory for tpu_custom_call.1']
    #allocation5 [shape = 'u8[32768]{0}', space=vmem, size = 0x8000, scoped, tag = 'input window, operand 1, single buffered']
    #allocation6 [shape = 's32[1]{0}', space=sflag, size = 0x4, scoped, tag = 'scoped memory for tpu_custom_call.1']
    #allocation7 [shape = 'u8[1024]{0}', space=vmem, size = 0x400, scoped, tag = 'input window, operand 2, single buffered']
    #allocation8 [shape = 'u8[8192]{0}', space=vmem, size = 0x2000, scoped, tag = 'output window, operand 0']
    #allocation9 [shape = 'u8[8192]{0}', space=vmem, size = 0x2000, scoped, tag = 'output window, operand 1']
    #allocation10 [shape = 's32[2]{0}', space=sflag, size = 0x8, scoped, tag = 'scoped memory for tpu_custom_call.1']
    #allocation11 [shape = 'u8[8192]{0}', space=vmem, size = 0x2000, scoped, tag = 'output window, operand 2']
    #allocation12 [shape = 'u8[8192]{0}', space=vmem, size = 0x2000, scoped, tag = 'output window, operand 3']
    #allocation13 [shape = 's32[2]{0}', space=sflag, size = 0x8, scoped, tag = 'scoped memory for tpu_custom_call.1']
    #allocation14 [shape = 'u8[8192]{0}', space=vmem, size = 0x2000, scoped, tag = 'output window, operand 4']
    %13 = vsyncpa [#allocation3], 0
    %s14 = scalar_lea.sflag [#allocation3], 1
    %15 = vsyncpa %s14, 0
    %16 = vsyncpa [#allocation6], 0
    %17 = vsyncpa [#allocation4], 0
    %s18 = scalar_lea.sflag [#allocation4], 1
    %19 = vsyncpa %s18, 0
    %20 = vsyncpa [#allocation10], 0
    %s21 = scalar_lea.sflag [#allocation10], 1
    %22 = vsyncpa %s21, 0
    %23 = vsyncpa [#allocation13], 0
    %s24 = scalar_lea.sflag [#allocation13], 1
    %25 = vsyncpa %s24, 0
    loop: start=0, step=1, limit=4
    $region2: #{tpu_custom_call.1} parent=1 // loop_pre_header
      _
    $region3: #{tpu_custom_call.1} parent=1 // loop_header
      %s27 = sphi 0, %s31
      %p28 = scmp.ge.s32.totalorder %s27, 4
      %s37 = sphi 0, %s39
      %s40 = sphi 0, %s37
      %s41 = sphi 0, %s40
      %s57 = sphi 0, %s41
      %s61 = sphi 0, %s61
      %s63 = sphi 0, %s61
      %s64 = sphi 0, %s63
      %s78 = sphi 0, %s64
      %s82 = sphi 0, %s82
      %s84 = sphi 0, %s82
      %s85 = sphi 0, %s84
      %s99 = sphi 0, %s85
      %s105 = sphi 0, %s107
      %s108 = sphi 0, %s105
      %s109 = sphi 0, %s108
      %s125 = sphi 0, %s109
      %s131 = sphi 0, %s133
      %s134 = sphi 0, %s131
      %s135 = sphi 0, %s134
      %s151 = sphi 0, %s135
      %s157 = sphi 0, %s159
      %s160 = sphi 0, %s157
      %s161 = sphi 0, %s160
      %s177 = sphi 0, %s161
      %s183 = sphi 0, %s185
      %s186 = sphi 0, %s183
      %s187 = sphi 0, %s186
      %s203 = sphi 0, %s187
      %s209 = sphi 0, %s211
      %s212 = sphi 0, %s209
      %s213 = sphi 0, %s212
      %s229 = sphi 0, %s213
    $region4: #{tpu_custom_call.1} parent=1 // loop_header_branch
      %30 = sbr.rel (%p28) target = $region8
    $region5: #{tpu_custom_call.1} parent=1 // loop_body
      %s32 = ssub.s32 %s27, 1
      %s33 = ssub.s32 %s27, 2
      %s34 = sadd.s32 %s27, 1
      %s35 = ssub.s32 %s27, %s34
      %p36 = scmp.eq.s32.totalorder %s35, 0
      %s38 = sadd.s32 %s37, 1
      %s39 = scalar_select %p36, %s37, %s38
      %p42 = pneg %p36
      %p43 = scmp.eq.s32.totalorder %s27, 1
      %p44 = por %p42, %p43
      %p45 = scmp.ne.s32.totalorder %s37, %s40
      %p46 = scmp.eq.s32.totalorder %s27, 0
      %p47 = por %p45, %p46
      %p48 = scmp.ne.s32.totalorder %s37, %s40
      %p49 = scmp.eq.s32.totalorder %s32, 1
      %p50 = por %p48, %p49
      %p51 = scmp.ne.s32.totalorder %s40, %s41
      %p52 = scmp.eq.s32.totalorder %s32, 0
      %p53 = por %p51, %p52
      %p54 = scmp.ne.s32.totalorder %s40, %s41
      %p55 = scmp.eq.s32.totalorder %s33, 1
      %p56 = por %p54, %p55
      %p58 = scmp.ne.s32.totalorder %s41, %s57
      %p59 = scmp.eq.s32.totalorder %s33, 0
      %p60 = por %p58, %p59
      %s62 = sadd.s32 %s61, 1
      %p65 = scmp.eq.s32.totalorder %s27, 1
      %p66 = scmp.ne.s32.totalorder %s61, %s63
      %p67 = scmp.eq.s32.totalorder %s27, 0
      %p68 = por %p66, %p67
      %p69 = scmp.ne.s32.totalorder %s61, %s63
      %p70 = scmp.eq.s32.totalorder %s32, 1
      %p71 = por %p69, %p70
      %p72 = scmp.ne.s32.totalorder %s63, %s64
      %p73 = scmp.eq.s32.totalorder %s32, 0
      %p74 = por %p72, %p73
      %p75 = scmp.ne.s32.totalorder %s63, %s64
      %p76 = scmp.eq.s32.totalorder %s33, 1
      %p77 = por %p75, %p76
      %p79 = scmp.ne.s32.totalorder %s64, %s78
      %p80 = scmp.eq.s32.totalorder %s33, 0
      %p81 = por %p79, %p80
      %s83 = sadd.s32 %s82, 1
      %p86 = scmp.eq.s32.totalorder %s27, 1
      %p87 = scmp.ne.s32.totalorder %s82, %s84
      %p88 = scmp.eq.s32.totalorder %s27, 0
      %p89 = por %p87, %p88
      %p90 = scmp.ne.s32.totalorder %s82, %s84
      %p91 = scmp.eq.s32.totalorder %s32, 1
      %p92 = por %p90, %p91
      %p93 = scmp.ne.s32.totalorder %s84, %s85
      %p94 = scmp.eq.s32.totalorder %s32, 0
      %p95 = por %p93, %p94
      %p96 = scmp.ne.s32.totalorder %s84, %s85
      %p97 = scmp.eq.s32.totalorder %s33, 1
      %p98 = por %p96, %p97
      %p100 = scmp.ne.s32.totalorder %s85, %s99
      %p101 = scmp.eq.s32.totalorder %s33, 0
      %p102 = por %p100, %p101
      %s103 = ssub.s32 %s27, %s34
      %p104 = scmp.eq.s32.totalorder %s103, 0
      %s106 = sadd.s32 %s105, 1
      %s107 = scalar_select %p104, %s105, %s106
      %p110 = pneg %p104
      %p111 = scmp.eq.s32.totalorder %s27, 1
      %p112 = por %p110, %p111
      %p113 = scmp.ne.s32.totalorder %s105, %s108
      %p114 = scmp.eq.s32.totalorder %s27, 0
      %p115 = por %p113, %p114
      %p116 = scmp.ne.s32.totalorder %s105, %s108
      %p117 = scmp.eq.s32.totalorder %s32, 1
      %p118 = por %p116, %p117
      %p119 = scmp.ne.s32.totalorder %s108, %s109
      %p120 = scmp.eq.s32.totalorder %s32, 0
      %p121 = por %p119, %p120
      %p122 = scmp.ne.s32.totalorder %s108, %s109
      %p123 = scmp.eq.s32.totalorder %s33, 1
      %p124 = por %p122, %p123
      %p126 = scmp.ne.s32.totalorder %s109, %s125
      %p127 = scmp.eq.s32.totalorder %s33, 0
      %p128 = por %p126, %p127
      %s129 = ssub.s32 %s27, %s34
      %p130 = scmp.eq.s32.totalorder %s129, 0
      %s132 = sadd.s32 %s131, 1
      %s133 = scalar_select %p130, %s131, %s132
      %p136 = pneg %p130
      %p137 = scmp.eq.s32.totalorder %s27, 1
      %p138 = por %p136, %p137
      %p139 = scmp.ne.s32.totalorder %s131, %s134
      %p140 = scmp.eq.s32.totalorder %s27, 0
      %p141 = por %p139, %p140
      %p142 = scmp.ne.s32.totalorder %s131, %s134
      %p143 = scmp.eq.s32.totalorder %s32, 1
      %p144 = por %p142, %p143
      %p145 = scmp.ne.s32.totalorder %s134, %s135
      %p146 = scmp.eq.s32.totalorder %s32, 0
      %p147 = por %p145, %p146
      %p148 = scmp.ne.s32.totalorder %s134, %s135
      %p149 = scmp.eq.s32.totalorder %s33, 1
      %p150 = por %p148, %p149
      %p152 = scmp.ne.s32.totalorder %s135, %s151
      %p153 = scmp.eq.s32.totalorder %s33, 0
      %p154 = por %p152, %p153
      %s155 = ssub.s32 %s27, %s34
      %p156 = scmp.eq.s32.totalorder %s155, 0
      %s158 = sadd.s32 %s157, 1
      %s159 = scalar_select %p156, %s157, %s158
      %p162 = pneg %p156
      %p163 = scmp.eq.s32.totalorder %s27, 1
      %p164 = por %p162, %p163
      %p165 = scmp.ne.s32.totalorder %s157, %s160
      %p166 = scmp.eq.s32.totalorder %s27, 0
      %p167 = por %p165, %p166
      %p168 = scmp.ne.s32.totalorder %s157, %s160
      %p169 = scmp.eq.s32.totalorder %s32, 1
      %p170 = por %p168, %p169
      %p171 = scmp.ne.s32.totalorder %s160, %s161
      %p172 = scmp.eq.s32.totalorder %s32, 0
      %p173 = por %p171, %p172
      %p174 = scmp.ne.s32.totalorder %s160, %s161
      %p175 = scmp.eq.s32.totalorder %s33, 1
      %p176 = por %p174, %p175
      %p178 = scmp.ne.s32.totalorder %s161, %s177
      %p179 = scmp.eq.s32.totalorder %s33, 0
      %p180 = por %p178, %p179
      %s181 = ssub.s32 %s27, %s34
      %p182 = scmp.eq.s32.totalorder %s181, 0
      %s184 = sadd.s32 %s183, 1
      %s185 = scalar_select %p182, %s183, %s184
      %p188 = pneg %p182
      %p189 = scmp.eq.s32.totalorder %s27, 1
      %p190 = por %p188, %p189
      %p191 = scmp.ne.s32.totalorder %s183, %s186
      %p192 = scmp.eq.s32.totalorder %s27, 0
      %p193 = por %p191, %p192
      %p194 = scmp.ne.s32.totalorder %s183, %s186
      %p195 = scmp.eq.s32.totalorder %s32, 1
      %p196 = por %p194, %p195
      %p197 = scmp.ne.s32.totalorder %s186, %s187
      %p198 = scmp.eq.s32.totalorder %s32, 0
      %p199 = por %p197, %p198
      %p200 = scmp.ne.s32.totalorder %s186, %s187
      %p201 = scmp.eq.s32.totalorder %s33, 1
      %p202 = por %p200, %p201
      %p204 = scmp.ne.s32.totalorder %s187, %s203
      %p205 = scmp.eq.s32.totalorder %s33, 0
      %p206 = por %p204, %p205
      %s207 = ssub.s32 %s27, %s34
      %p208 = scmp.eq.s32.totalorder %s207, 0
      %s210 = sadd.s32 %s209, 1
      %s211 = scalar_select %p208, %s209, %s210
      %p214 = pneg %p208
      %p215 = scmp.eq.s32.totalorder %s27, 1
      %p216 = por %p214, %p215
      %p217 = scmp.ne.s32.totalorder %s209, %s212
      %p218 = scmp.eq.s32.totalorder %s27, 0
      %p219 = por %p217, %p218
      %p220 = scmp.ne.s32.totalorder %s209, %s212
      %p221 = scmp.eq.s32.totalorder %s32, 1
      %p222 = por %p220, %p221
      %p223 = scmp.ne.s32.totalorder %s212, %s213
      %p224 = scmp.eq.s32.totalorder %s32, 0
      %p225 = por %p223, %p224
      %p226 = scmp.ne.s32.totalorder %s212, %s213
      %p227 = scmp.eq.s32.totalorder %s33, 1
      %p228 = por %p226, %p227
      %p230 = scmp.ne.s32.totalorder %s213, %s229
      %p231 = scmp.eq.s32.totalorder %s33, 0
      %p232 = por %p230, %p231
      %p233 = scmp.le.s32.totalorder 1, %s27
      %p234 = scmp.lt.s32.totalorder %s27, 3
      %p235 = pnand %p233, %p234
      %p236 = pneg %p235
      // Predicated region
      $region9: #{tpu_custom_call.1} parent=5 // pred_check
        _
      $region10: #{tpu_custom_call.1} parent=5 // pred_check_branch
        %238 = sbr.rel (%p235) target = $region12
      $region11: #{tpu_custom_call.1} parent=5 // pred_region
        %s239 = ssub.s32 %s27, 1
        // Predicated region
        $region13: #{tpu_custom_call.1} parent=11 // pred_check
          %p240 = pneg %p74
        $region14: #{tpu_custom_call.1} parent=11 // pred_check_branch
          %242 = sbr.rel (%p240) target = $region16
        $region15: #{tpu_custom_call.1} parent=11 // pred_region
          %244 = vsyncadd [#allocation6], 0
          %s245 = sshll.u32 %s1, 4
          %s246 = int_to_ptr.hbm [resolvable:$true] %s245
          %s247 = sshll.u32 [#allocation5], 4
          %s248 = int_to_ptr.vmem [resolvable:$true] %s247
          %253 = dma.hbm_to_vmem [thread:$0]  %s246, 1024, %s248, [#allocation6], 256, 256, 16
        $region16: #{tpu_custom_call.1} parent=11 // pred_fallthru
          _
        // Predicated region
        $region17: #{tpu_custom_call.1} parent=11 // pred_check
          %p254 = pneg %p95
        $region18: #{tpu_custom_call.1} parent=11 // pred_check_branch
          %256 = sbr.rel (%p254) target = $region20
        $region19: #{tpu_custom_call.1} parent=11 // pred_region
          %258 = vsyncadd [#allocation6], 0
          %s260 = sshll.u32 %s2, 4
          %s261 = int_to_ptr.hbm [resolvable:$true] %s260
          %s262 = sshll.u32 [#allocation7], 4
          %s263 = int_to_ptr.vmem [resolvable:$true] %s262
          %265 = dma.hbm_to_vmem [thread:$0]  %s261, 32, %s263, [#allocation6]
        $region20: #{tpu_custom_call.1} parent=11 // pred_fallthru
          _
      $region12: #{tpu_custom_call.1} parent=5 // pred_fallthru
        _
      %p266 = scmp.lt.s32.totalorder %s27, 2
      // Predicated region
      $region21: #{tpu_custom_call.1} parent=5 // pred_check
        %p267 = pneg %p266
      $region22: #{tpu_custom_call.1} parent=5 // pred_check_branch
        %269 = sbr.rel (%p267) target = $region24
      $region23: #{tpu_custom_call.1} parent=5 // pred_region
        // Predicated region
        $region25: #{tpu_custom_call.1} parent=23 // pred_check
          %p270 = pneg %p47
        $region26: #{tpu_custom_call.1} parent=23 // pred_check_branch
          %272 = sbr.rel (%p270) target = $region28
        $region27: #{tpu_custom_call.1} parent=23 // pred_region
          %s273 = sand.u32 %s37, 1
          %s274 = scalar_lea.sflag [#allocation3], %s273
          %s275 = sand.u32 %s37, 1
          %s276 = smul.addr %s275, 8
          %s277 = scalar_lea.vmem [#allocation2], %s276
          %279 = vsyncadd %s274, 0
          %s280 = smul.addr %s27, 8
          %s281 = scalar_lea.hbm %s0, %s280
          %s283 = sshll.u32 %s281, 4
          %s284 = int_to_ptr.hbm [resolvable:$true] %s283
          %s285 = sshll.u32 %s277, 4
          %s286 = int_to_ptr.vmem [resolvable:$true] %s285
          %288 = dma.hbm_to_vmem [thread:$0]  %s284, 128, %s286, %s274
        $region28: #{tpu_custom_call.1} parent=23 // pred_fallthru
          _
      $region24: #{tpu_custom_call.1} parent=5 // pred_fallthru
        _
      %p289 = scmp.le.s32.totalorder 1, %s27
      %p290 = scmp.lt.s32.totalorder %s27, 3
      %p291 = pnand %p289, %p290
      %p292 = pneg %p291
      // Predicated region
      $region29: #{tpu_custom_call.1} parent=5 // pred_check
        _
      $region30: #{tpu_custom_call.1} parent=5 // pred_check_branch
        %294 = sbr.rel (%p291) target = $region32
      $region31: #{tpu_custom_call.1} parent=5 // pred_region
        %s295 = ssub.s32 %s27, 1
        %s296 = sand.u32 %s40, 1
        %s297 = scalar_lea.sflag [#allocation3], %s296
        %s298 = sand.u32 %s40, 1
        %s299 = smul.addr %s298, 8
        %s300 = scalar_lea.vmem [#allocation2], %s299
        // Predicated region
        $region33: #{tpu_custom_call.1} parent=31 // pred_check
          %p301 = pneg %p53
        $region34: #{tpu_custom_call.1} parent=31 // pred_check_branch
          %303 = sbr.rel (%p301) target = $region36
        $region35: #{tpu_custom_call.1} parent=31 // pred_region
          %305 = dma.done %s297, 128
        $region36: #{tpu_custom_call.1} parent=31 // pred_fallthru
          _
        // Predicated region
        $region37: #{tpu_custom_call.1} parent=31 // pred_check
          %p306 = pneg %p74
        $region38: #{tpu_custom_call.1} parent=31 // pred_check_branch
          %308 = sbr.rel (%p306) target = $region40
        $region39: #{tpu_custom_call.1} parent=31 // pred_region
          %310 = dma.done [#allocation6], 1024
        $region40: #{tpu_custom_call.1} parent=31 // pred_fallthru
          _
        // Predicated region
        $region41: #{tpu_custom_call.1} parent=31 // pred_check
          %p311 = pneg %p95
        $region42: #{tpu_custom_call.1} parent=31 // pred_check_branch
          %313 = sbr.rel (%p311) target = $region44
        $region43: #{tpu_custom_call.1} parent=31 // pred_region
          %315 = dma.done [#allocation6], 32
        $region44: #{tpu_custom_call.1} parent=31 // pred_fallthru
          _
        %s316 = sand.u32 %s40, 1
        %s317 = scalar_lea.sflag [#allocation3], %s316
        %s318 = sand.u32 %s40, 1
        %s319 = smul.addr %s318, 8
        %s320 = scalar_lea.vmem [#allocation2], %s319
        %p321 = pneg %p53
        %p322 = pneg %p50
        %p323 = pneg %p74
        %p324 = pneg %p71
        %p325 = pneg %p95
        %p326 = pneg %p92
        %p327 = pneg %p121
        %p328 = pneg %p118
        %s329 = sand.u32 %s108, 1
        %s330 = scalar_lea.sflag [#allocation4], %s329
        %s331 = sand.u32 %s108, 1
        %s332 = smul.addr %s331, 8
        %s333 = scalar_lea.vmem [#allocation8], %s332
        %p334 = pneg %p147
        %p335 = pneg %p144
        %s336 = sand.u32 %s32, 1
        %s337 = scalar_lea.sflag [#allocation10], %s336
        %s338 = sand.u32 %s134, 1
        %s339 = smul.addr %s338, 8
        %s340 = scalar_lea.vmem [#allocation9], %s339
        %p341 = pneg %p173
        %p342 = pneg %p170
        %s343 = sand.u32 %s32, 1
        %s344 = scalar_lea.sflag [#allocation10], %s343
        %s345 = sand.u32 %s160, 1
        %s346 = smul.addr %s345, 8
        %s347 = scalar_lea.vmem [#allocation11], %s346
        %p348 = pneg %p199
        %p349 = pneg %p196
        %s350 = sand.u32 %s32, 1
        %s351 = scalar_lea.sflag [#allocation13], %s350
        %s352 = sand.u32 %s186, 1
        %s353 = smul.addr %s352, 8
        %s354 = scalar_lea.vmem [#allocation12], %s353
        %p355 = pneg %p225
        %p356 = pneg %p222
        %s357 = sand.u32 %s32, 1
        %s358 = scalar_lea.sflag [#allocation13], %s357
        %s359 = sand.u32 %s212, 1
        %s360 = smul.addr %s359, 8
        %s361 = scalar_lea.vmem [#allocation14], %s360
        %v362 = vld [vmem:[%s300] sm:$0xff]
        %v363 = vld [vmem:[#allocation5] sm:$0xff]
        %v364 = vld [vmem:[#allocation5 + $0x8] sm:$0xff]
        %v365 = vld [vmem:[#allocation5 + $0x10] sm:$0xff]
        %v366 = vld [vmem:[#allocation5 + $0x18] sm:$0xff]
        %v367 = vld [vmem:[#allocation5 + $0x20] sm:$0xff]
        %v368 = vld [vmem:[#allocation5 + $0x28] sm:$0xff]
        %v369 = vld [vmem:[#allocation5 + $0x30] sm:$0xff]
        %v370 = vld [vmem:[#allocation5 + $0x38] sm:$0xff]
        %v371 = vld [vmem:[#allocation7] sm:$0x3]
        %v373 = vperm.slane %v371, 0
        %v374 = vperm.slane %v371, 1
        %vm377 = vcmask 261120
        %v379 = vsel %vm377, %v362, 0
        %381 = vmatpush.msra.mxu0 0.0
        %382 = vmatpush.msra.mxu0 0.0
        %383 = vmatpush.msra.mxu0 0.0
        %384 = vmatpush.msra.mxu0 0.0
        %385 = vmatpush.msra.mxu0 0.0
        %386 = vmatpush.msra.mxu0 0.0
        %387 = vmatpush.msra.mxu0 0.0
        %388 = vmatpush.msra.mxu0 0.0
        %389 = vmatpush.msra.mxu0 0.0
        %390 = vmatpush.msra.mxu0 0.0
        %391 = vmatpush.msra.mxu0 0.0
        %392 = vmatpush.msra.mxu0 0.0
        %393 = vmatpush.msra.mxu0 %v369
        %394 = vmatpush.msra.mxu0 %v367
        %395 = vmatpush.msra.mxu0 %v365
        %396 = vmatpush.msra.mxu0 %v363
        %397 = vmatmul.f32.gmra.mxu0 %v379
        %v398 = vpop.f32.mrf.mxu0
        %v399 = vadd.f32 %v373, %v398
        %400 = vdwg.mxu0
        %401 = vmatpush.msra.mxu0 0.0
        %402 = vmatpush.msra.mxu0 0.0
        %403 = vmatpush.msra.mxu0 0.0
        %404 = vmatpush.msra.mxu0 0.0
        %405 = vmatpush.msra.mxu0 0.0
        %406 = vmatpush.msra.mxu0 0.0
        %407 = vmatpush.msra.mxu0 0.0
        %408 = vmatpush.msra.mxu0 0.0
        %409 = vmatpush.msra.mxu0 0.0
        %410 = vmatpush.msra.mxu0 0.0
        %411 = vmatpush.msra.mxu0 0.0
        %412 = vmatpush.msra.mxu0 0.0
        %413 = vmatpush.msra.mxu0 %v370
        %414 = vmatpush.msra.mxu0 %v368
        %415 = vmatpush.msra.mxu0 %v366
        %416 = vmatpush.msra.mxu0 %v364
        %417 = vmatmul.f32.gmra.mxu0 %v379
        %v418 = vpop.f32.mrf.mxu0
        %v419 = vadd.f32 %v374, %v418
        %420 = vdwg.mxu0
        %v421 = vxor.u32 %v399, 2147483648
        %v422 = vmul.f32 %v421, 1.442695
        %v423 = vpow.pop %v422
        %v424 = vadd.f32 %v423, 1.0
        %v425 = vrcp.pop %v424
        %v426 = vmul.f32 %v424, %v425
        %v427 = vsub.f32 1.0, %v426
        %v428 = vmul.f32 %v425, %v427
        %v429 = vadd.f32 %v425, %v428
        %vm430 = vweird.f32 %v424
        %vm431 = vweird.f32 %v425
        %vm432 = vmor %vm430, %vm431
        %v433 = vsel %vm432, %v425, %v429
        %v434 = vand.u32 2147483647, %v424
        %vm435 = vcmp.eq.f32.partialorder %v434, 8.507059e+37
        %v436 = vand.u32 %v424, 2147483648
        %v437 = vor.u32 1.1754944e-38, %v436
        %v438 = vsel %vm435, %v437, %v433
        %v439 = vmul.f32 1.0, %v438
        %440 = vst.msk [vmem:[%s333] sm:$0xff] %vm377, %v439
        %v441 = vtanh.pop %v399
        %443 = vrot.lane.b32.xlu0 %v441, 96
        %v444 = vpop.permute.xlu0 %443
        %446 = vst.msk [vmem:[%s340] sm:$0xff] %vm377, %v444
        %v447 = vmax.f32 %v399, 0.0
        %449 = vrot.lane.b32.xlu0 %v447, 64
        %v450 = vpop.permute.xlu0 %449
        %452 = vst.msk [vmem:[%s347] sm:$0xff] %vm377, %v450
        %v453 = vmul.f32 %v399, 0.5
        %v454 = vmul.f32 %v399, 0.044715
        %v455 = vmul.f32 %v454, %v399
        %v456 = vmul.f32 %v455, %v399
        %v457 = vadd.f32 %v399, %v456
        %v458 = vmul.f32 %v457, 0.7978846
        %v459 = vtanh.pop %v458
        %v460 = vadd.f32 %v459, 1.0
        %v461 = vmul.f32 %v453, %v460
        %463 = vrot.lane.b32.xlu0 %v461, 32
        %v464 = vpop.permute.xlu0 %463
        %466 = vst.msk [vmem:[%s354] sm:$0xff] %vm377, %v464
        %v467 = vxor.u32 %v419, 2147483648
        %v468 = vmul.f32 %v467, 1.442695
        %v469 = vpow.pop %v468
        %v470 = vadd.f32 %v469, 1.0
        %v471 = vrcp.pop %v470
        %v472 = vmul.f32 %v470, %v471
        %v473 = vsub.f32 1.0, %v472
        %v474 = vmul.f32 %v471, %v473
        %v475 = vadd.f32 %v471, %v474
        %vm476 = vweird.f32 %v470
        %vm477 = vweird.f32 %v471
        %vm478 = vmor %vm476, %vm477
        %v479 = vsel %vm478, %v471, %v475
        %v480 = vand.u32 2147483647, %v470
        %vm481 = vcmp.eq.f32.partialorder %v480, 8.507059e+37
        %v482 = vand.u32 %v470, 2147483648
        %v483 = vor.u32 1.1754944e-38, %v482
        %v484 = vsel %vm481, %v483, %v479
        %v485 = vmul.f32 1.0, %v484
        %v486 = vmul.f32 %v419, %v485
        %487 = vst.msk [vmem:[%s361] sm:$0xff] %vm377, %v486
        %s488 = sand.u32 %s108, 1
        %s489 = scalar_lea.sflag [#allocation4], %s488
        %s490 = sand.u32 %s108, 1
        %s491 = smul.addr %s490, 8
        %s492 = scalar_lea.vmem [#allocation8], %s491
        %s493 = sand.u32 %s32, 1
        %s494 = scalar_lea.sflag [#allocation10], %s493
        %s495 = sand.u32 %s134, 1
        %s496 = smul.addr %s495, 8
        %s497 = scalar_lea.vmem [#allocation9], %s496
        %s498 = sand.u32 %s32, 1
        %s499 = scalar_lea.sflag [#allocation10], %s498
        %s500 = sand.u32 %s160, 1
        %s501 = smul.addr %s500, 8
        %s502 = scalar_lea.vmem [#allocation11], %s501
        %s503 = sand.u32 %s32, 1
        %s504 = scalar_lea.sflag [#allocation13], %s503
        %s505 = sand.u32 %s186, 1
        %s506 = smul.addr %s505, 8
        %s507 = scalar_lea.vmem [#allocation12], %s506
        %s508 = sand.u32 %s32, 1
        %s509 = scalar_lea.sflag [#allocation13], %s508
        %s510 = sand.u32 %s212, 1
        %s511 = smul.addr %s510, 8
        %s512 = scalar_lea.vmem [#allocation14], %s511
        // Predicated region
        $region45: #{tpu_custom_call.1} parent=31 // pred_check
          %p513 = pneg %p118
        $region46: #{tpu_custom_call.1} parent=31 // pred_check_branch
          %515 = sbr.rel (%p513) target = $region48
        $region47: #{tpu_custom_call.1} parent=31 // pred_region
          %517 = vsyncadd %s489, 0
          %s518 = smul.addr %s32, 8
          %s519 = scalar_lea.hbm %s3, %s518
          %s521 = sshll.u32 %s492, 4
          %s522 = int_to_ptr.vmem [resolvable:$true] %s521
          %s523 = sshll.u32 %s519, 4
          %s524 = int_to_ptr.hbm [resolvable:$true] %s523
          %526 = dma.vmem_to_hbm [thread:$0]  %s522, 128, %s524, %s489
        $region48: #{tpu_custom_call.1} parent=31 // pred_fallthru
          _
        // Predicated region
        $region49: #{tpu_custom_call.1} parent=31 // pred_check
          %p527 = pneg %p144
        $region50: #{tpu_custom_call.1} parent=31 // pred_check_branch
          %529 = sbr.rel (%p527) target = $region52
        $region51: #{tpu_custom_call.1} parent=31 // pred_region
          %531 = vsyncadd %s494, 0
          %s532 = smul.addr %s32, 8
          %s533 = scalar_lea.hbm %s4, %s532
          %s535 = sshll.u32 %s497, 4
          %s536 = int_to_ptr.vmem [resolvable:$true] %s535
          %s537 = sshll.u32 %s533, 4
          %s538 = int_to_ptr.hbm [resolvable:$true] %s537
          %540 = dma.vmem_to_hbm [thread:$0]  %s536, 128, %s538, %s494
        $region52: #{tpu_custom_call.1} parent=31 // pred_fallthru
          _
        // Predicated region
        $region53: #{tpu_custom_call.1} parent=31 // pred_check
          %p541 = pneg %p170
        $region54: #{tpu_custom_call.1} parent=31 // pred_check_branch
          %543 = sbr.rel (%p541) target = $region56
        $region55: #{tpu_custom_call.1} parent=31 // pred_region
          %545 = vsyncadd %s499, 0
          %s546 = smul.addr %s32, 8
          %s547 = scalar_lea.hbm %s5, %s546
          %s549 = sshll.u32 %s502, 4
          %s550 = int_to_ptr.vmem [resolvable:$true] %s549
          %s551 = sshll.u32 %s547, 4
          %s552 = int_to_ptr.hbm [resolvable:$true] %s551
          %554 = dma.vmem_to_hbm [thread:$0]  %s550, 128, %s552, %s499
        $region56: #{tpu_custom_call.1} parent=31 // pred_fallthru
          _
        // Predicated region
        $region57: #{tpu_custom_call.1} parent=31 // pred_check
          %p555 = pneg %p196
        $region58: #{tpu_custom_call.1} parent=31 // pred_check_branch
          %557 = sbr.rel (%p555) target = $region60
        $region59: #{tpu_custom_call.1} parent=31 // pred_region
          %559 = vsyncadd %s504, 0
          %s560 = smul.addr %s32, 8
          %s561 = scalar_lea.hbm %s6, %s560
          %s563 = sshll.u32 %s507, 4
          %s564 = int_to_ptr.vmem [resolvable:$true] %s563
          %s565 = sshll.u32 %s561, 4
          %s566 = int_to_ptr.hbm [resolvable:$true] %s565
          %568 = dma.vmem_to_hbm [thread:$0]  %s564, 128, %s566, %s504
        $region60: #{tpu_custom_call.1} parent=31 // pred_fallthru
          _
        // Predicated region
        $region61: #{tpu_custom_call.1} parent=31 // pred_check
          %p569 = pneg %p222
        $region62: #{tpu_custom_call.1} parent=31 // pred_check_branch
          %571 = sbr.rel (%p569) target = $region64
        $region63: #{tpu_custom_call.1} parent=31 // pred_region
          %573 = vsyncadd %s509, 0
          %s574 = smul.addr %s32, 8
          %s575 = scalar_lea.hbm %s7, %s574
          %s577 = sshll.u32 %s512, 4
          %s578 = int_to_ptr.vmem [resolvable:$true] %s577
          %s579 = sshll.u32 %s575, 4
          %s580 = int_to_ptr.hbm [resolvable:$true] %s579
          %582 = dma.vmem_to_hbm [thread:$0]  %s578, 128, %s580, %s509
        $region64: #{tpu_custom_call.1} parent=31 // pred_fallthru
          _
      $region32: #{tpu_custom_call.1} parent=5 // pred_fallthru
        _
      %p583 = scmp.le.s32.totalorder 2, %s27
      // Predicated region
      $region65: #{tpu_custom_call.1} parent=5 // pred_check
        %p584 = pneg %p583
      $region66: #{tpu_custom_call.1} parent=5 // pred_check_branch
        %586 = sbr.rel (%p584) target = $region68
      $region67: #{tpu_custom_call.1} parent=5 // pred_region
        %s587 = ssub.s32 %s27, 2
        // Predicated region
        $region69: #{tpu_custom_call.1} parent=67 // pred_check
          %p588 = pneg %p124
        $region70: #{tpu_custom_call.1} parent=67 // pred_check_branch
          %590 = sbr.rel (%p588) target = $region72
        $region71: #{tpu_custom_call.1} parent=67 // pred_region
          %s591 = sand.u32 %s109, 1
          %s592 = scalar_lea.sflag [#allocation4], %s591
          %s593 = sand.u32 %s109, 1
          %s594 = smul.addr %s593, 8
          %s595 = scalar_lea.vmem [#allocation8], %s594
          %597 = dma.done %s592, 128
        $region72: #{tpu_custom_call.1} parent=67 // pred_fallthru
          _
        // Predicated region
        $region73: #{tpu_custom_call.1} parent=67 // pred_check
          %p598 = pneg %p150
        $region74: #{tpu_custom_call.1} parent=67 // pred_check_branch
          %600 = sbr.rel (%p598) target = $region76
        $region75: #{tpu_custom_call.1} parent=67 // pred_region
          %s601 = sand.u32 %s33, 1
          %s602 = scalar_lea.sflag [#allocation10], %s601
          %s603 = sand.u32 %s135, 1
          %s604 = smul.addr %s603, 8
          %s605 = scalar_lea.vmem [#allocation9], %s604
          %607 = dma.done %s602, 128
        $region76: #{tpu_custom_call.1} parent=67 // pred_fallthru
          _
        // Predicated region
        $region77: #{tpu_custom_call.1} parent=67 // pred_check
          %p608 = pneg %p176
        $region78: #{tpu_custom_call.1} parent=67 // pred_check_branch
          %610 = sbr.rel (%p608) target = $region80
        $region79: #{tpu_custom_call.1} parent=67 // pred_region
          %s611 = sand.u32 %s33, 1
          %s612 = scalar_lea.sflag [#allocation10], %s611
          %s613 = sand.u32 %s161, 1
          %s614 = smul.addr %s613, 8
          %s615 = scalar_lea.vmem [#allocation11], %s614
          %617 = dma.done %s612, 128
        $region80: #{tpu_custom_call.1} parent=67 // pred_fallthru
          _
        // Predicated region
        $region81: #{tpu_custom_call.1} parent=67 // pred_check
          %p618 = pneg %p202
        $region82: #{tpu_custom_call.1} parent=67 // pred_check_branch
          %620 = sbr.rel (%p618) target = $region84
        $region83: #{tpu_custom_call.1} parent=67 // pred_region
          %s621 = sand.u32 %s33, 1
          %s622 = scalar_lea.sflag [#allocation13], %s621
          %s623 = sand.u32 %s187, 1
          %s624 = smul.addr %s623, 8
          %s625 = scalar_lea.vmem [#allocation12], %s624
          %627 = dma.done %s622, 128
        $region84: #{tpu_custom_call.1} parent=67 // pred_fallthru
          _
        // Predicated region
        $region85: #{tpu_custom_call.1} parent=67 // pred_check
          %p628 = pneg %p228
        $region86: #{tpu_custom_call.1} parent=67 // pred_check_branch
          %630 = sbr.rel (%p628) target = $region88
        $region87: #{tpu_custom_call.1} parent=67 // pred_region
          %s631 = sand.u32 %s33, 1
          %s632 = scalar_lea.sflag [#allocation13], %s631
          %s633 = sand.u32 %s213, 1
          %s634 = smul.addr %s633, 8
          %s635 = scalar_lea.vmem [#allocation14], %s634
          %637 = dma.done %s632, 128
        $region88: #{tpu_custom_call.1} parent=67 // pred_fallthru
          _
      $region68: #{tpu_custom_call.1} parent=5 // pred_fallthru
        _
    $region6: #{tpu_custom_call.1} parent=1 // loop_footer
      %s31 = sadd.s32 1, %s27
    $region7: #{tpu_custom_call.1} parent=1 // loop_footer_branch
      %26 = sbr.rel target = $region3
    $region8: #{tpu_custom_call.1} parent=1 // loop_exit
      _
    %638 = vsyncpa [#allocation3], 1
    %s639 = scalar_lea.sflag [#allocation3], 1
    %640 = vsyncpa %s639, 1
    %641 = vsyncpa [#allocation6], 1
    %642 = vsyncpa [#allocation4], 1
    %s643 = scalar_lea.sflag [#allocation4], 1
    %644 = vsyncpa %s643, 1
    %645 = vsyncpa [#allocation10], 1
    %s646 = scalar_lea.sflag [#allocation10], 1
    %647 = vsyncpa %s646, 1
    %648 = vsyncpa [#allocation13], 1
    %s649 = scalar_lea.sflag [#allocation13], 1
    %650 = vsyncpa %s649, 1

</llo_original>
